<compile_context>
chip_gen: v7x
topology: tpu7x:2x2x1
jax: 0.10.0
libtpu: 0.0.40
codegen_flags: <defaults>
</compile_context>

<pallas_src>
import functools

import jax
import jax.numpy as jnp
from jax.experimental import pallas as pl
from jax.experimental.pallas import tpu as pltpu


# --------------------------------------------------------------------------
# Pallas kernel: (E, Kc) @ (Kc, tm) + bias, store channels-first (E, tm).
# --------------------------------------------------------------------------
def _matmul_bias_kernel(a_ref, w_ref, b_ref, o_ref):
    # a_ref: (Kc, tm) bf16  -- K-major patch columns for this (batch, M) tile
    # w_ref: (E, Kc)  bf16  -- projection weight (resident, constant index_map)
    # b_ref: (E, 1)   f32   -- bias column (broadcast over lanes)
    # o_ref: (E, tm)  f32   -- channels-first output tile (lane-dense in tm)
    acc = jnp.dot(w_ref[...], a_ref[...], preferred_element_type=jnp.float32)
    o_ref[...] = (acc + b_ref[...]).astype(o_ref.dtype)


def _conv_as_matmul(patches, w_mat, b_col, *, tm=1024):
    """patches: (B, Kc, Msp) bf16; w_mat: (E, Kc) bf16; b_col: (E, 1) f32.

    Returns (B, E, Msp) f32.
    """
    B, Kc, Msp = patches.shape
    E = w_mat.shape[0]
    # Lane axis of A/out tiles: multiple of 128, or the full (small) extent.
    tm = Msp if Msp <= tm else tm
    grid = (B, pl.cdiv(Msp, tm))

    cost = pl.CostEstimate(
        flops=2 * B * Msp * Kc * E,
        transcendentals=0,
        bytes_accessed=(patches.size * 2 + w_mat.size * 2 + b_col.size * 4
                        + B * E * Msp * 4),
    )

    return pl.pallas_call(
        _matmul_bias_kernel,
        out_shape=jax.ShapeDtypeStruct((B, E, Msp), jnp.float32),
        grid_spec=pltpu.PrefetchScalarGridSpec(
            num_scalar_prefetch=0,
            grid=grid,
            in_specs=[
                pl.BlockSpec((None, Kc, tm), lambda b, j: (b, 0, j)),  # patches
                pl.BlockSpec((E, Kc), lambda b, j: (0, 0)),            # weight
                pl.BlockSpec((E, 1), lambda b, j: (0, 0)),             # bias
            ],
            out_specs=pl.BlockSpec((None, E, tm), lambda b, j: (b, 0, j)),
        ),
        compiler_params=pltpu.CompilerParams(
            dimension_semantics=("parallel", "parallel"),
            vmem_limit_bytes=32 * 1024 * 1024,
        ),
        cost_estimate=cost,
    )(patches, w_mat, b_col)


# --------------------------------------------------------------------------
# PatchEmbed forward
# --------------------------------------------------------------------------
def patch_embed_forward(x, weight, bias, *, kernel_size=4, stride=2, padding=1,
                        tm=1024):
    """x: (B, C, H, W, D) f32; weight: (E, C, k, k, k) f32; bias: (E,) f32."""
    B, C, H, W, D = x.shape
    E = weight.shape[0]
    ks = kernel_size

    Ho = (H + 2 * padding - ks) // stride + 1
    Wo = (W + 2 * padding - ks) // stride + 1
    Do = (D + 2 * padding - ks) // stride + 1
    Msp = Ho * Wo * Do
    Kc = C * ks ** 3

    # --- im2col (host glue, bf16, K-major) --------------------------------
    # Column order (c, kh, kw, kd) matches weight.reshape(E, C*k^3); keeping
    # the layout (B, Kc, Msp) means neither side needs a transpose.
    xp = jnp.pad(
        x.astype(jnp.bfloat16),
        ((0, 0), (0, 0), (padding, padding), (padding, padding),
         (padding, padding)))
    cols = []
    for kh in range(ks):
        for kw in range(ks):
            for kd in range(ks):
                cols.append(
                    xp[:, :,
                       kh:kh + stride * Ho:stride,
                       kw:kw + stride * Wo:stride,
                       kd:kd + stride * Do:stride])          # (B, C, Ho, Wo, Do)
    col = jnp.stack(cols, axis=2)                             # (B, C, k^3, Ho, Wo, Do)
    patches = col.reshape(B, Kc, Msp)                         # (B, Kc, Msp) bf16

    # Weight/bias: flatten, bf16 weight for the MXU, f32 bias column.
    w_mat = weight.reshape(E, Kc).astype(jnp.bfloat16)        # (E, Kc)
    b_col = bias.astype(jnp.float32).reshape(E, 1)            # (E, 1)

    # --- hot path: Pallas matmul + bias, channels-first output -------------
    out = _conv_as_matmul(patches, w_mat, b_col, tm=tm)       # (B, E, Msp) f32

    # Pure reshape (no data movement): (B, E, Ho, Wo, Do), like torch.cat(dim=1).
    return out.reshape(B, E, Ho, Wo, Do)


# --------------------------------------------------------------------------
# Reference (pure JAX conv) for the correctness check.
# --------------------------------------------------------------------------
def _reference_conv3d(x, weight, bias, *, stride=2, padding=1):
    dn = jax.lax.conv_dimension_numbers(
        x.shape, weight.shape, ("NCDHW", "OIDHW", "NCDHW"))
    y = jax.lax.conv_general_dilated(
        x, weight,
        window_strides=(stride, stride, stride),
        padding=[(padding, padding)] * 3,
        dimension_numbers=dn)
    return y + bias.reshape(1, -1, 1, 1, 1)


if __name__ == "__main__":
    # Small shapes consistent with the module's forward:
    # x: (B, C, H, W, D), patch_size=[4] -> one Conv3d(C, embed_dim, 4, 2, 1).
    B, C, H, W, D = 2, 3, 8, 8, 8
    embed_dim = 32
    ks = 4

    key = jax.random.PRNGKey(0)
    kx, kw, kb = jax.random.split(key, 3)

    x = jax.random.normal(kx, (B, C, H, W, D), dtype=jnp.float32)
    fan_in = C * ks ** 3
    weight = jax.random.normal(kw, (embed_dim, C, ks, ks, ks),
                               dtype=jnp.float32) * (1.0 / jnp.sqrt(fan_in))
    bias = jax.random.normal(kb, (embed_dim,), dtype=jnp.float32) * 0.01

    fwd = jax.jit(functools.partial(patch_embed_forward,
                                    kernel_size=ks, stride=2, padding=1))
    out = jax.block_until_ready(fwd(x, weight, bias))

    # Reference on the same bf16-quantized operands (kernel accumulates in f32).
    xq = x.astype(jnp.bfloat16).astype(jnp.float32)
    wq = weight.astype(jnp.bfloat16).astype(jnp.float32)
    ref = _reference_conv3d(xq, wq, bias, stride=2, padding=1)

    assert out.shape == (B, embed_dim, H // 2, W // 2, D // 2), out.shape
    max_err = float(jnp.max(jnp.abs(out - ref)))
    assert jnp.allclose(out, ref, atol=1e-2, rtol=1e-2), max_err

    print("KERNEL_OK")
</pallas_src>

<mosaic_0001>
module attributes {stable_mosaic.version = 11 : i64} {
  func.func @_matmul_bias_kernel(%arg0: i32, %arg1: i32, %arg2: memref<1x192x64xbf16, #tpu.memory_space<vmem>>, %arg3: memref<32x192xbf16, #tpu.memory_space<vmem>>, %arg4: memref<32x1xf32, #tpu.memory_space<vmem>>, %arg5: memref<1x32x64xf32, #tpu.memory_space<vmem>>) attributes {dimension_semantics = [#tpu.dimension_semantics<parallel>, #tpu.dimension_semantics<parallel>], iteration_bounds = array<i64: 2, 1>, scalar_prefetch = 0 : i64, scratch_operands = 0 : i64, tpu.core_type = #tpu.core_type<tc>, window_params = [{transform_indices = @transform_0, window_bounds = array<i64: 1, 192, 64>}, {pipeline_mode = #tpu.pipeline_mode<synchronous>, transform_indices = @transform_1, window_bounds = array<i64: 32, 192>}, {pipeline_mode = #tpu.pipeline_mode<synchronous>, transform_indices = @transform_2, window_bounds = array<i64: 32, 1>}, {transform_indices = @transform_3, window_bounds = array<i64: 1, 32, 64>}]} {
    %c0 = arith.constant 0 : index
    %c0_0 = arith.constant 0 : index
    %0 = vector.load %arg3[%c0, %c0_0] : memref<32x192xbf16, #tpu.memory_space<vmem>>, vector<32x192xbf16>
    %c0_1 = arith.constant 0 : index
    %c0_2 = arith.constant 0 : index
    %c0_3 = arith.constant 0 : index
    %1 = vector.load %arg2[%c0_1, %c0_2, %c0_3] : memref<1x192x64xbf16, #tpu.memory_space<vmem>>, vector<1x192x64xbf16>
    %2 = vector.shape_cast %1 : vector<1x192x64xbf16> to vector<192x64xbf16>
    %cst = arith.constant dense<0.000000e+00> : vector<32x64xf32>
    %3 = tpu.matmul %0, %2, %cst {dimension_numbers = #tpu.dot_dimension_numbers<[1], [0], [0], [1], [0, 0, 1, 1], [], []>} : vector<32x192xbf16>, vector<192x64xbf16>, vector<32x64xf32> -> vector<32x64xf32>
    %c0_4 = arith.constant 0 : index
    %c0_5 = arith.constant 0 : index
    %4 = vector.load %arg4[%c0_4, %c0_5] : memref<32x1xf32, #tpu.memory_space<vmem>>, vector<32x1xf32>
    %5 = vector.broadcast %4 : vector<32x1xf32> to vector<32x64xf32>
    %6 = arith.addf %3, %5 : vector<32x64xf32>
    %c0_6 = arith.constant 0 : index
    %c0_7 = arith.constant 0 : index
    %c0_8 = arith.constant 0 : index
    %7 = vector.load %arg5[%c0_6, %c0_7, %c0_8] : memref<1x32x64xf32, #tpu.memory_space<vmem>>, vector<1x32x64xf32>
    %8 = vector.shape_cast %7 : vector<1x32x64xf32> to vector<32x64xf32>
    %9 = vector.shape_cast %6 : vector<32x64xf32> to vector<1x32x64xf32>
    tpu.vector_store %arg5[%c0_6, %c0_7, %c0_8], %9 {strides = array<i32>} : memref<1x32x64xf32, #tpu.memory_space<vmem>>, vector<1x32x64xf32>,
    return
  }
  func.func @transform_0(%arg0: i32, %arg1: i32) -> (i32, i32, i32) {
    %c0_i32 = arith.constant 0 : i32
    %c0_i32_0 = arith.constant 0 : i32
    return %arg0, %c0_i32, %arg1 : i32, i32, i32
  }
  func.func @transform_1(%arg0: i32, %arg1: i32) -> (i32, i32) {
    %c0_i32 = arith.constant 0 : i32
    %c0_i32_0 = arith.constant 0 : i32
    %c0_i32_1 = arith.constant 0 : i32
    return %c0_i32, %c0_i32_0 : i32, i32
  }
  func.func @transform_2(%arg0: i32, %arg1: i32) -> (i32, i32) {
    %c0_i32 = arith.constant 0 : i32
    %c0_i32_0 = arith.constant 0 : i32
    %c0_i32_1 = arith.constant 0 : i32
    return %c0_i32, %c0_i32_0 : i32, i32
  }
  func.func @transform_3(%arg0: i32, %arg1: i32) -> (i32, i32, i32) {
    %c0_i32 = arith.constant 0 : i32
    %c0_i32_0 = arith.constant 0 : i32
    return %arg0, %c0_i32, %arg1 : i32, i32, i32
  }
}

</mosaic_0001>

<llo_original>
// kernel: patch_embed_forward.1
$region0: #{patch_embed_forward.1}
  #allocation0 [shape = 'u32[]', space=smem, size = 0x4, offset = 0x4, fixed_abs, tag = 'smem constant byte address 0x4 - core index']
  #allocation1 [shape = 'u32[144,128]{1,0:T(1,128)}', space=vmem, size = 0x12000, scoped, tag = 'internal scratch']
  %s0 = inlined_call_operand.vmem [shape: bf16[2,192,64], index: 0, kind: input, shape index: {}]
  %s1 = inlined_call_operand.vmem [shape: bf16[32,192], index: 1, kind: input, shape index: {}]
  %s2 = inlined_call_operand.vmem [shape: f32[32,1], index: 2, kind: input, shape index: {}]
  %s3 = inlined_call_operand.vmem [shape: f32[2,32,64], index: 3, kind: output, shape index: {}]
  %s4 = sld [smem:[#allocation0]]
  $region45: #{patch_embed_forward.1} parent=0
    _
  %s6 = ssub.s32 1, %s4
  %s7 = scalar_select 0, %s6, %s4
  loop: start=0, step=1, limit=4
  $region2: #{patch_embed_forward.1} parent=0 // loop_pre_header
    _
  $region3: #{patch_embed_forward.1} parent=0 // loop_header
    %s9 = sphi 0, %s13
    %p10 = scmp.ge.s32.totalorder %s9, 4
    %s16 = sphi 0, %s28
    %s17 = sphi 0, %s24
    %s18 = sphi 0, %s16
    %s19 = sphi 0, %s17
    %s20 = sphi 0, %s18
    %s21 = sphi 0, %s19
    %s33 = sphi 0, %s35
    %s36 = sphi 0, %s33
    %s37 = sphi 0, %s36
    %s53 = sphi 0, %s37
    %s57 = sphi 0, %s57
    %s59 = sphi 0, %s57
    %s60 = sphi 0, %s59
    %s74 = sphi 0, %s60
    %s78 = sphi 0, %s78
    %s80 = sphi 0, %s78
    %s81 = sphi 0, %s80
    %s95 = sphi 0, %s81
    %s103 = sphi 0, %s105
    %s106 = sphi 0, %s103
    %s107 = sphi 0, %s106
    %s123 = sphi 0, %s107
  $region4: #{patch_embed_forward.1} parent=0 // loop_header_branch
    %12 = sbr.rel (%p10) target = $region8
  $region5: #{patch_embed_forward.1} parent=0 // loop_body
    %s14 = ssub.s32 %s9, 1
    %s15 = ssub.s32 %s9, 2
    %s22 = sadd.s32 1, %s17
    %p23 = scmp.ge.s32.totalorder %s22, 1
    %s24 = scalar_select %p23, 0, %s22
    %s25 = sadd.s32 1, %s16
    %s26 = scalar_select %p23, %s25, %s16
    %p27 = scmp.ge.s32.totalorder %s26, 2
    %s28 = scalar_select %p27, 0, %s26
    %s29 = ssub.s32 %s16, %s28
    %s30 = ssub.s32 %s17, %s24
    %s31 = sor.u32 %s29, %s30
    %p32 = scmp.eq.s32.totalorder %s31, 0
    %s34 = sadd.s32 %s33, 1
    %s35 = scalar_select %p32, %s33, %s34
    %p38 = pneg %p32
    %p39 = scmp.eq.s32.totalorder %s9, 1
    %p40 = por %p38, %p39
    %p41 = scmp.ne.s32.totalorder %s33, %s36
    %p42 = scmp.eq.s32.totalorder %s9, 0
    %p43 = por %p41, %p42
    %p44 = scmp.ne.s32.totalorder %s33, %s36
    %p45 = scmp.eq.s32.totalorder %s14, 1
    %p46 = por %p44, %p45
    %p47 = scmp.ne.s32.totalorder %s36, %s37
    %p48 = scmp.eq.s32.totalorder %s14, 0
    %p49 = por %p47, %p48
    %p50 = scmp.ne.s32.totalorder %s36, %s37
    %p51 = scmp.eq.s32.totalorder %s15, 1
    %p52 = por %p50, %p51
    %p54 = scmp.ne.s32.totalorder %s37, %s53
    %p55 = scmp.eq.s32.totalorder %s15, 0
    %p56 = por %p54, %p55
    %s58 = sadd.s32 %s57, 1
    %p61 = scmp.eq.s32.totalorder %s9, 1
    %p62 = scmp.ne.s32.totalorder %s57, %s59
    %p63 = scmp.eq.s32.totalorder %s9, 0
    %p64 = por %p62, %p63
    %p65 = scmp.ne.s32.totalorder %s57, %s59
    %p66 = scmp.eq.s32.totalorder %s14, 1
    %p67 = por %p65, %p66
    %p68 = scmp.ne.s32.totalorder %s59, %s60
    %p69 = scmp.eq.s32.totalorder %s14, 0
    %p70 = por %p68, %p69
    %p71 = scmp.ne.s32.totalorder %s59, %s60
    %p72 = scmp.eq.s32.totalorder %s15, 1
    %p73 = por %p71, %p72
    %p75 = scmp.ne.s32.totalorder %s60, %s74
    %p76 = scmp.eq.s32.totalorder %s15, 0
    %p77 = por %p75, %p76
    %s79 = sadd.s32 %s78, 1
    %p82 = scmp.eq.s32.totalorder %s9, 1
    %p83 = scmp.ne.s32.totalorder %s78, %s80
    %p84 = scmp.eq.s32.totalorder %s9, 0
    %p85 = por %p83, %p84
    %p86 = scmp.ne.s32.totalorder %s78, %s80
    %p87 = scmp.eq.s32.totalorder %s14, 1
    %p88 = por %p86, %p87
    %p89 = scmp.ne.s32.totalorder %s80, %s81
    %p90 = scmp.eq.s32.totalorder %s14, 0
    %p91 = por %p89, %p90
    %p92 = scmp.ne.s32.totalorder %s80, %s81
    %p93 = scmp.eq.s32.totalorder %s15, 1
    %p94 = por %p92, %p93
    %p96 = scmp.ne.s32.totalorder %s81, %s95
    %p97 = scmp.eq.s32.totalorder %s15, 0
    %p98 = por %p96, %p97
    %s99 = ssub.s32 %s16, %s28
    %s100 = ssub.s32 %s17, %s24
    %s101 = sor.u32 %s99, %s100
    %p102 = scmp.eq.s32.totalorder %s101, 0
    %s104 = sadd.s32 %s103, 1
    %s105 = scalar_select %p102, %s103, %s104
    %p108 = pneg %p102
    %p109 = scmp.eq.s32.totalorder %s9, 1
    %p110 = por %p108, %p109
    %p111 = scmp.ne.s32.totalorder %s103, %s106
    %p112 = scmp.eq.s32.totalorder %s9, 0
    %p113 = por %p111, %p112
    %p114 = scmp.ne.s32.totalorder %s103, %s106
    %p115 = scmp.eq.s32.totalorder %s14, 1
    %p116 = por %p114, %p115
    %p117 = scmp.ne.s32.totalorder %s106, %s107
    %p118 = scmp.eq.s32.totalorder %s14, 0
    %p119 = por %p117, %p118
    %p120 = scmp.ne.s32.totalorder %s106, %s107
    %p121 = scmp.eq.s32.totalorder %s15, 1
    %p122 = por %p120, %p121
    %p124 = scmp.ne.s32.totalorder %s107, %s123
    %p125 = scmp.eq.s32.totalorder %s15, 0
    %p126 = por %p124, %p125
    %p127 = scmp.le.s32.totalorder 1, %s9
    %p128 = scmp.lt.s32.totalorder %s9, 3
    %p129 = pnand %p127, %p128
    %p130 = pneg %p129
    // Predicated region
    $region9: #{patch_embed_forward.1} parent=5 // pred_check
      _
    $region10: #{patch_embed_forward.1} parent=5 // pred_check_branch
      %132 = sbr.rel (%p129) target = $region12
    $region11: #{patch_embed_forward.1} parent=5 // pred_region
      %s133 = ssub.s32 %s9, 1
      // Predicated region
      $region13: #{patch_embed_forward.1} parent=11 // pred_check
        %p134 = pneg %p70
      $region14: #{patch_embed_forward.1} parent=11 // pred_check_branch
        %136 = sbr.rel (%p134) target = $region16
      $region15: #{patch_embed_forward.1} parent=11 // pred_region
        _
      $region16: #{patch_embed_forward.1} parent=11 // pred_fallthru
        _
      // Predicated region
      $region17: #{patch_embed_forward.1} parent=11 // pred_check
        %p137 = pneg %p91
      $region18: #{patch_embed_forward.1} parent=11 // pred_check_branch
        %139 = sbr.rel (%p137) target = $region20
      $region19: #{patch_embed_forward.1} parent=11 // pred_region
        _
      $region20: #{patch_embed_forward.1} parent=11 // pred_fallthru
        _
    $region12: #{patch_embed_forward.1} parent=5 // pred_fallthru
      _
    %p140 = scmp.lt.s32.totalorder %s9, 2
    // Predicated region
    $region21: #{patch_embed_forward.1} parent=5 // pred_check
      %p141 = pneg %p140
    $region22: #{patch_embed_forward.1} parent=5 // pred_check_branch
      %143 = sbr.rel (%p141) target = $region24
    $region23: #{patch_embed_forward.1} parent=5 // pred_region
      // Predicated region
      $region25: #{patch_embed_forward.1} parent=23 // pred_check
        %p144 = pneg %p43
      $region26: #{patch_embed_forward.1} parent=23 // pred_check_branch
        %146 = sbr.rel (%p144) target = $region28
      $region27: #{patch_embed_forward.1} parent=23 // pred_region
        %p147 = scmp.lt.s32.totalorder %s16, 1
        %s148 = scalar_select %p147, %s16, 1
        %p149 = scmp.lt.s32.totalorder %s17, 0
        %s150 = scalar_select %p149, %s17, 0
        %s151 = smul.addr %s148, 24
        %s152 = sadd.s32 %s150, %s151
        %s153 = smul.addr %s152, 4
        %s154 = scalar_lea.vmem %s0, %s153
      $region28: #{patch_embed_forward.1} parent=23 // pred_fallthru
        _
    $region24: #{patch_embed_forward.1} parent=5 // pred_fallthru
      _
    %p155 = scmp.le.s32.totalorder 1, %s9
    %p156 = scmp.lt.s32.totalorder %s9, 3
    %p157 = pnand %p155, %p156
    %p158 = pneg %p157
    // Predicated region
    $region29: #{patch_embed_forward.1} parent=5 // pred_check
      _
    $region30: #{patch_embed_forward.1} parent=5 // pred_check_branch
      %160 = sbr.rel (%p157) target = $region32
    $region31: #{patch_embed_forward.1} parent=5 // pred_region
      %s161 = ssub.s32 %s9, 1
      %p162 = scmp.lt.s32.totalorder %s18, 1
      %s163 = scalar_select %p162, %s18, 1
      %p164 = scmp.lt.s32.totalorder %s19, 0
      %s165 = scalar_select %p164, %s19, 0
      %s166 = smul.addr %s163, 24
      %s167 = sadd.s32 %s165, %s166
      %s168 = smul.addr %s167, 4
      %s169 = scalar_lea.vmem %s0, %s168
      %p170 = pneg %p49
      %p171 = pneg %p46
      %p172 = pneg %p70
      %p173 = pneg %p67
      %p174 = pneg %p91
      %p175 = pneg %p88
      %p176 = pneg %p119
      %p177 = pneg %p116
      %p178 = scmp.lt.s32.totalorder %s18, 1
      %s179 = scalar_select %p178, %s18, 1
      %p180 = scmp.lt.s32.totalorder %s19, 0
      %s181 = scalar_select %p180, %s19, 0
      %s182 = smul.addr %s179, 4
      %s183 = sadd.s32 %s181, %s182
      %s184 = smul.addr %s183, 8
      %s185 = scalar_lea.vmem %s3, %s184
      %p186 = scmp.lt.s32.totalorder %s18, 1
      %s187 = scalar_select %p186, %s18, 1
      %p188 = scmp.lt.s32.totalorder %s19, 0
      %s189 = scalar_select %p188, %s19, 0
      %s190 = smul.addr %s187, 24
      %s191 = sadd.s32 %s189, %s190
      %s192 = smul.addr %s191, 4
      %s193 = scalar_lea.vmem %s0, %s192
      %p194 = scmp.lt.s32.totalorder %s18, 1
      %s195 = scalar_select %p194, %s18, 1
      %p196 = scmp.lt.s32.totalorder %s19, 0
      %s197 = scalar_select %p196, %s19, 0
      %s198 = smul.addr %s195, 4
      %s199 = sadd.s32 %s197, %s198
      %s200 = smul.addr %s199, 8
      %s201 = scalar_lea.vmem %s3, %s200
      %v203 = vld [vmem:[%s1] sm:$0xff]
      %v204 = vld [vmem:[%s1 + $0x8] sm:$0xff]
      %v205 = vld [vmem:[%s1 + $0x10] sm:$0xff]
      %v206 = vld [vmem:[%s1 + $0x18] sm:$0xff]
      %v207 = vld [vmem:[%s193] sm:$0xf]
      %v208 = vld [vmem:[%s193 + $0x4] sm:$0xf]
      %v209 = vld [vmem:[%s193 + $0x8] sm:$0xf]
      %v210 = vld [vmem:[%s193 + $0xc] sm:$0xf]
      %v211 = vld [vmem:[%s193 + $0x10] sm:$0xf]
      %v212 = vld [vmem:[%s193 + $0x14] sm:$0xf]
      %v213 = vld [vmem:[%s193 + $0x18] sm:$0xf]
      %v214 = vld [vmem:[%s193 + $0x1c] sm:$0xf]
      %v215 = vld [vmem:[%s193 + $0x20] sm:$0xf]
      %v216 = vld [vmem:[%s193 + $0x24] sm:$0xf]
      %v217 = vld [vmem:[%s193 + $0x28] sm:$0xf]
      %v218 = vld [vmem:[%s193 + $0x2c] sm:$0xf]
      %v219 = vld [vmem:[%s193 + $0x30] sm:$0xf]
      %v220 = vld [vmem:[%s193 + $0x34] sm:$0xf]
      %v221 = vld [vmem:[%s193 + $0x38] sm:$0xf]
      %v222 = vld [vmem:[%s193 + $0x3c] sm:$0xf]
      %v223 = vld [vmem:[%s193 + $0x40] sm:$0xf]
      %v224 = vld [vmem:[%s193 + $0x44] sm:$0xf]
      %v225 = vld [vmem:[%s193 + $0x48] sm:$0xf]
      %v226 = vld [vmem:[%s193 + $0x4c] sm:$0xf]
      %v227 = vld [vmem:[%s193 + $0x50] sm:$0xf]
      %v228 = vld [vmem:[%s193 + $0x54] sm:$0xf]
      %v229 = vld [vmem:[%s193 + $0x58] sm:$0xf]
      %v230 = vld [vmem:[%s193 + $0x5c] sm:$0xf]
      %v231 = vld [vmem:[%s2] sm:$0xff]
      %v232 = vld [vmem:[%s2 + $0x8] sm:$0xff]
      %v233 = vld [vmem:[%s2 + $0x10] sm:$0xff]
      %v234 = vld [vmem:[%s2 + $0x18] sm:$0xff]
      %236 = vset.pattern.permute.xlu0 0
      %237 = vperm.xlu0 %236, %v231
      %v238 = vpop.permute.xlu0 %237
      %241 = vset.pattern.permute.xlu0 0
      %242 = vperm.xlu0 %241, %v232
      %v243 = vpop.permute.xlu0 %242
      %246 = vset.pattern.permute.xlu0 0
      %247 = vperm.xlu0 %246, %v233
      %v248 = vpop.permute.xlu0 %247
      %251 = vset.pattern.permute.xlu0 0
      %252 = vperm.xlu0 %251, %v234
      %v253 = vpop.permute.xlu0 %252
      %v259 = vunpack.c.l.b16 %v203
      %v260 = vunpack.c.h.b16 %v203
      %v261 = vunpack.c.l.b16 %v204
      %v262 = vunpack.c.h.b16 %v204
      %v263 = vunpack.c.l.b16 %v205
      %v264 = vunpack.c.h.b16 %v205
      %v265 = vunpack.c.l.b16 %v206
      %v266 = vunpack.c.h.b16 %v206
      %v267 = vpack.c.b16 %v261, %v259
      %v268 = vpack.c.b16 %v262, %v260
      %v269 = vpack.c.b16 %v265, %v263
      %v270 = vpack.c.b16 %v266, %v264
      %v297 = vunpack.c.l.b16 %v207
      %v298 = vunpack.c.l.b16 %v208
      %v299 = vunpack.c.l.b16 %v209
      %v300 = vunpack.c.l.b16 %v210
      %v301 = vunpack.c.l.b16 %v211
      %v302 = vunpack.c.l.b16 %v212
      %v303 = vunpack.c.l.b16 %v213
      %v304 = vunpack.c.l.b16 %v214
      %v305 = vunpack.c.l.b16 %v215
      %v306 = vunpack.c.l.b16 %v216
      %v307 = vunpack.c.l.b16 %v217
      %v308 = vunpack.c.l.b16 %v218
      %v309 = vunpack.c.l.b16 %v219
      %v310 = vunpack.c.l.b16 %v220
      %v311 = vunpack.c.l.b16 %v221
      %v312 = vunpack.c.l.b16 %v222
      %v313 = vunpack.c.l.b16 %v223
      %v314 = vunpack.c.l.b16 %v224
      %v315 = vunpack.c.l.b16 %v225
      %v316 = vunpack.c.l.b16 %v226
      %v317 = vunpack.c.l.b16 %v227
      %v318 = vunpack.c.l.b16 %v228
      %v319 = vunpack.c.l.b16 %v229
      %v320 = vunpack.c.l.b16 %v230
      %v321 = vpack.c.b16 %v298, %v297
      %v322 = vpack.c.b16 %v300, %v299
      %v323 = vpack.c.b16 %v302, %v301
      %v324 = vpack.c.b16 %v304, %v303
      %v325 = vpack.c.b16 %v306, %v305
      %v326 = vpack.c.b16 %v308, %v307
      %v327 = vpack.c.b16 %v310, %v309
      %v328 = vpack.c.b16 %v312, %v311
      %v329 = vpack.c.b16 %v314, %v313
      %v330 = vpack.c.b16 %v316, %v315
      %v331 = vpack.c.b16 %v318, %v317
      %v332 = vpack.c.b16 %v320, %v319
      %vm345 = vcmask 523264
      %v347 = vsel %vm345, %v268, 0
      %v350 = vsel %vm345, %v270, 0
      %352 = vmatprep.subr.bf16.mxu0 0
      %353 = vmatpush1.bf16.msra.mxu0 %v321
      %354 = vmatprep.subr.bf16.mxu0 0
      %355 = vmatpush1.bf16.msra.mxu0 %v322
      %356 = vmatprep.subr.bf16.mxu0 0
      %357 = vmatpush1.bf16.msra.mxu0 %v323
      %358 = vmatprep.subr.bf16.mxu0 0
      %359 = vmatpush1.bf16.msra.mxu0 %v324
      %360 = vmatprep.subr.bf16.mxu0 0
      %361 = vmatpush1.bf16.msra.mxu0 %v325
      %362 = vmatprep.subr.bf16.mxu0 0
      %363 = vmatpush1.bf16.msra.mxu0 %v326
      %364 = vmatprep.subr.bf16.mxu0 0
      %365 = vmatpush1.bf16.msra.mxu0 %v327
      %366 = vmatprep.subr.bf16.mxu0 0
      %367 = vmatpush1.bf16.msra.mxu0 %v328
      %368 = vmatprep.subr.bf16.mxu0 0
      %369 = vmatpush1.bf16.msra.mxu0 %v329
      %370 = vmatprep.subr.bf16.mxu0 0
      %371 = vmatpush1.bf16.msra.mxu0 %v330
      %372 = vmatprep.subr.bf16.mxu0 0
      %373 = vmatpush1.bf16.msra.mxu0 %v331
      %374 = vmatprep.subr.bf16.mxu0 0
      %375 = vmatpush1.bf16.msra.mxu0 %v332
      %376 = vmatprep.subr.bf16.mxu0 0
      %377 = vmatpush1.bf16.msra.mxu0 0
      %378 = vmatprep.subr.bf16.mxu0 0
      %379 = vmatpush1.bf16.msra.mxu0 0
      %380 = vmatprep.subr.bf16.mxu0 0
      %381 = vmatpush1.bf16.msra.mxu0 0
      %382 = vmatprep.subr.bf16.mxu0 0
      %383 = vmatpush1.bf16.msra.mxu0 0
      %384 = vmatprep.mubr.bf16.mxu0 %v347
      %385 = vmatmul.mubr.bf16.gmra.mrb[0].mxu0 %v267
      %v386 = vpop.f32.mrb[0].mxu0
      %v387 = vadd.f32 %v238, %v386
      %v388 = vpop.f32.mrb[0].mxu0
      %v389 = vpop.f32.mrb[0].mxu0
      %v390 = vadd.f32 %v243, %v389
      %v391 = vpop.f32.mrb[0].mxu0
      %392 = vmatprep.mubr.bf16.mxu0 %v350
      %393 = vmatmul.mubr.bf16.gmra.mrb[0].mxu0 %v269
      %v394 = vpop.f32.mrb[0].mxu0
      %v395 = vadd.f32 %v248, %v394
      %v396 = vpop.f32.mrb[0].mxu0
      %v397 = vpop.f32.mrb[0].mxu0
      %v398 = vadd.f32 %v253, %v397
      %v399 = vpop.f32.mrb[0].mxu0
      %400 = vdwg.mxu0
      %401 = vst.msk [vmem:[%s201] sm:$0xff] %vm345, %v387
      %402 = vst.msk [vmem:[%s201 + $0x8] sm:$0xff] %vm345, %v390
      %403 = vst.msk [vmem:[%s201 + $0x10] sm:$0xff] %vm345, %v395
      %404 = vst.msk [vmem:[%s201 + $0x18] sm:$0xff] %vm345, %v398
      %p405 = scmp.lt.s32.totalorder %s18, 1
      %s406 = scalar_select %p405, %s18, 1
      %p407 = scmp.lt.s32.totalorder %s19, 0
      %s408 = scalar_select %p407, %s19, 0
      %s409 = smul.addr %s406, 4
      %s410 = sadd.s32 %s408, %s409
      %s411 = smul.addr %s410, 8
      %s412 = scalar_lea.vmem %s3, %s411
      // Predicated region
      $region33: #{patch_embed_forward.1} parent=31 // pred_check
        %p413 = pneg %p116
      $region34: #{patch_embed_forward.1} parent=31 // pred_check_branch
        %415 = sbr.rel (%p413) target = $region36
      $region35: #{patch_embed_forward.1} parent=31 // pred_region
        _
      $region36: #{patch_embed_forward.1} parent=31 // pred_fallthru
        _
    $region32: #{patch_embed_forward.1} parent=5 // pred_fallthru
      _
    %p416 = scmp.le.s32.totalorder 2, %s9
    // Predicated region
    $region37: #{patch_embed_forward.1} parent=5 // pred_check
      %p417 = pneg %p416
    $region38: #{patch_embed_forward.1} parent=5 // pred_check_branch
      %419 = sbr.rel (%p417) target = $region40
    $region39: #{patch_embed_forward.1} parent=5 // pred_region
      %s420 = ssub.s32 %s9, 2
      // Predicated region
      $region41: #{patch_embed_forward.1} parent=39 // pred_check
        %p421 = pneg %p122
      $region42: #{patch_embed_forward.1} parent=39 // pred_check_branch
        %423 = sbr.rel (%p421) target = $region44
      $region43: #{patch_embed_forward.1} parent=39 // pred_region
        %p424 = scmp.lt.s32.totalorder %s20, 1
        %s425 = scalar_select %p424, %s20, 1
        %p426 = scmp.lt.s32.totalorder %s21, 0
        %s427 = scalar_select %p426, %s21, 0
        %s428 = smul.addr %s425, 4
        %s429 = sadd.s32 %s427, %s428
        %s430 = smul.addr %s429, 8
        %s431 = scalar_lea.vmem %s3, %s430
      $region44: #{patch_embed_forward.1} parent=39 // pred_fallthru
        _
    $region40: #{patch_embed_forward.1} parent=5 // pred_fallthru
      _
  $region6: #{patch_embed_forward.1} parent=0 // loop_footer
    %s13 = sadd.s32 1, %s9
  $region7: #{patch_embed_forward.1} parent=0 // loop_footer_branch
    %8 = sbr.rel target = $region3
  $region8: #{patch_embed_forward.1} parent=0 // loop_exit
    _

</llo_original>
